<compile_context>
chip_gen: v5e
topology: v5e:2x2
jax: 0.10.0
libtpu: 0.0.40
codegen_flags: <defaults>
</compile_context>

<pallas_src>
import jax
import jax.numpy as jnp
import numpy as np
from jax import lax
from jax.experimental import pallas as pl
from jax.experimental.pallas import tpu as pltpu

BN_EPS = 1e-5
LEAKY_SLOPE = 0.01  # nn.LeakyReLU default negative_slope


def _bn_fold(gamma, beta, mean, var):
    scale = gamma / jnp.sqrt(var + BN_EPS)
    shift = beta - mean * scale
    return scale, shift


# ----------------------------------------------------------------------------
# One Res_DYConv1d_block on the full batch (traced inside the fused kernel)
# ----------------------------------------------------------------------------
def _block_compute(x, meta, refs):
    bs, C_in, L = x.shape
    C_out, K, ks, dil = meta["C_out"], meta["K"], meta["ks"], meta["dil"]
    use_res = meta["use_res"]
    pad = (ks - 1) // 2

    if use_res:
        attn_wT_ref, attn_b_ref, wcat_ref, shift_ref, resw_ref = refs
    else:
        attn_wT_ref, attn_b_ref, wcat_ref, shift_ref = refs

    # ---- Attention: avg-pool over L, 1x1 conv (C_in -> K), softmax over K (f32) ----
    pooled = jnp.mean(x, axis=2)                                           # (bs, C_in)
    logits = jnp.dot(pooled, attn_wT_ref[...],
                     preferred_element_type=jnp.float32) + attn_b_ref[...]  # (bs, K)
    logits = logits - jnp.max(logits, axis=1, keepdims=True)
    e = jnp.exp(logits)
    att = e / jnp.sum(e, axis=1, keepdims=True)                            # (bs, K)

    # ---- Expert aggregation: one MXU matmul over packed [BN-scaled W | BN-scaled bias] ----
    agg = jnp.dot(att, wcat_ref[...], preferred_element_type=jnp.float32)  # (bs, Fdim+C_out)
    Fdim = C_out * ks * C_in
    agg_w = agg[:, :Fdim].reshape(bs, C_out, ks * C_in)                    # (bs, C_out, ks*C_in)
    agg_b = agg[:, Fdim:]                                                  # (bs, C_out)

    # ---- im2col stack: per-tap shifts via XLU rolls + boundary masks (in-kernel "padding") ----
    lidx = lax.broadcasted_iota(jnp.int32, (bs, C_in, L), 2)
    taps = []
    for t in range(ks):
        off = t * dil - pad
        if off == 0:
            taps.append(x)
        else:
            xr = pltpu.roll(x, shift=(-off) % L, axis=2)
            valid = (lidx >= -off) & (lidx < L - off)
            taps.append(jnp.where(valid, xr, 0.0))
    if use_res:
        # fold the (BN-folded) 1x1 residual conv in as an extra "tap"
        taps.append(x)
        res_w = jnp.broadcast_to(resw_ref[...][None], (bs, C_out, C_in))
        agg_w = jnp.concatenate([agg_w, res_w], axis=2)                    # (bs, C_out, (ks+1)*C_in)
    x_stack = jnp.concatenate(taps, axis=1)                                # (bs, T*C_in, L)

    # ---- Fused conv (+ residual) matmul: bf16 inputs, f32 accumulation on the MXU ----
    out = jnp.einsum("bof,bfl->bol",
                     agg_w.astype(jnp.bfloat16),
                     x_stack.astype(jnp.bfloat16),
                     preferred_element_type=jnp.float32)                   # (bs, C_out, L)

    # ---- BN shift + aggregated bias (scale already folded into the weights) ----
    out = out + agg_b[:, :, None] + shift_ref[...][None, :, :]
    if not use_res:
        out = out + x                                                      # identity residual
    return jnp.where(out > 0, out, LEAKY_SLOPE * out)                      # LeakyReLU


def _make_stack_kernel(metas):
    def kernel(*refs):
        x_ref = refs[0]
        o_ref = refs[-1]
        params = refs[1:-1]
        x = x_ref[...]
        idx = 0
        for meta in metas:
            n = 5 if meta["use_res"] else 4
            x = _block_compute(x, meta, params[idx:idx + n])
            idx += n
        o_ref[...] = x.astype(o_ref.dtype)
    return kernel


# ----------------------------------------------------------------------------
# Wrapper: pack parameters, build one fused pallas_call for the whole stack
# ----------------------------------------------------------------------------
def dyconv1d_forward(x, block_params):
    bs, c_in, L = x.shape
    metas = []
    args = [x]
    in_specs = [pl.BlockSpec((bs, c_in, L), lambda i: (0, 0, 0))]

    for p in block_params:
        ks, dil = p["kernel_size"], p["dilation"]
        K, C_out = p["bias"].shape
        C_in = c_in
        pad = (ks - 1) // 2
        assert L + 2 * pad - dil * (ks - 1) == L, \
            "reference's .view(bs, out, l) requires output length == L"
        use_res = (C_in != C_out)

        bn_s, bn_b = _bn_fold(p["bn_gamma"], p["bn_beta"], p["bn_mean"], p["bn_var"])
        # packed [BN-scaled expert weights (tap-major) | BN-scaled expert bias]
        w = jnp.transpose(p["weight"], (0, 1, 3, 2)) * bn_s[None, :, None, None]
        w_flat = w.reshape(K, C_out * ks * C_in)                     # [k, o*(ks*C_in)+t*C_in+c]
        b_scaled = p["bias"] * bn_s[None, :]                          # (K, C_out)
        w_cat = jnp.concatenate([w_flat, b_scaled], axis=1)           # (K, C_out*ks*C_in + C_out)

        attn_wT = p["attn_w"][:, :, 0].T                              # (C_in, K)
        attn_b = p["attn_b"][None, :]                                 # (1, K)
        shift = bn_b[:, None]                                         # (C_out, 1)

        blk_args = [attn_wT, attn_b, w_cat, shift]
        blk_specs = [
            pl.BlockSpec((C_in, K), lambda i: (0, 0)),
            pl.BlockSpec((1, K), lambda i: (0, 0)),
            pl.BlockSpec((K, C_out * ks * C_in + C_out), lambda i: (0, 0)),
            pl.BlockSpec((C_out, 1), lambda i: (0, 0)),
        ]
        if use_res:
            rs, rsh = _bn_fold(p["res_bn_gamma"], p["res_bn_beta"],
                               p["res_bn_mean"], p["res_bn_var"])
            res_w_eff = p["res_w"][:, :, 0] * rs[:, None]             # (C_out, C_in)
            shift = shift + (p["res_b"] * rs + rsh)[:, None]
            blk_args[3] = shift
            blk_args.append(res_w_eff)
            blk_specs.append(pl.BlockSpec((C_out, C_in), lambda i: (0, 0)))

        args += blk_args
        in_specs += blk_specs
        metas.append(dict(C_in=C_in, C_out=C_out, K=K, ks=ks, dil=dil, use_res=use_res))
        c_in = C_out

    kernel = _make_stack_kernel(metas)
    return pl.pallas_call(
        kernel,
        out_shape=jax.ShapeDtypeStruct((bs, c_in, L), jnp.float32),
        grid=(1,),
        in_specs=in_specs,
        out_specs=pl.BlockSpec((bs, c_in, L), lambda i: (0, 0, 0)),
        compiler_params=pltpu.CompilerParams(dimension_semantics=("arbitrary",)),
    )(*args)


# ----------------------------------------------------------------------------
# Pure-JAX reference (same math, HIGHEST precision) for validation
# ----------------------------------------------------------------------------
def _block_reference(x, p):
    bs, C_in, L = x.shape
    ks, d = p["kernel_size"], p["dilation"]
    K, C_out = p["bias"].shape
    pad = (ks - 1) // 2
    hi = jax.lax.Precision.HIGHEST
    pooled = jnp.mean(x, axis=2)                                           # (bs, C_in)
    att = jnp.einsum("bc,kc->bk", pooled, p["attn_w"][:, :, 0], precision=hi) + p["attn_b"]
    att = jax.nn.softmax(att, axis=1)
    agg_w = jnp.einsum("bk,koct->boct", att, p["weight"], precision=hi)
    agg_b = jnp.einsum("bk,ko->bo", att, p["bias"], precision=hi)
    xp = jnp.pad(x, ((0, 0), (0, 0), (pad, pad)))
    out = agg_b[:, :, None] + jnp.zeros((bs, C_out, L), jnp.float32)
    for t in range(ks):
        out = out + jnp.einsum("boc,bcl->bol", agg_w[..., t],
                               xp[:, :, t * d:t * d + L], precision=hi)
    s, sh = _bn_fold(p["bn_gamma"], p["bn_beta"], p["bn_mean"], p["bn_var"])
    out = out * s[None, :, None] + sh[None, :, None]
    if C_in != C_out:
        r = jnp.einsum("oc,bcl->bol", p["res_w"][:, :, 0], x, precision=hi)
        r = r + p["res_b"][None, :, None]
        rs, rsh = _bn_fold(p["res_bn_gamma"], p["res_bn_beta"],
                           p["res_bn_mean"], p["res_bn_var"])
        r = r * rs[None, :, None] + rsh[None, :, None]
        out = out + r
    else:
        out = out + x
    return jnp.where(out > 0, out, LEAKY_SLOPE * out)


def dyconv1d_reference(x, block_params):
    result = x
    for p in block_params:
        result = _block_reference(result, p)
    return result


# ----------------------------------------------------------------------------
# Deterministic synthetic parameter init (shapes follow the module's __init__)
# ----------------------------------------------------------------------------
def init_dyconv1d_params(key, in_planes, out_planes, kernel_size, dilation, K):
    blocks = []
    c_in = in_planes
    for c_out in out_planes:
        key, k0, k1, k2, k3, k4, k5 = jax.random.split(key, 7)
        p = {
            "kernel_size": kernel_size,
            "dilation": dilation,
            "attn_w": 0.5 * jax.random.normal(k0, (K, c_in, 1), jnp.float32),
            "attn_b": 0.1 * jax.random.normal(k1, (K,), jnp.float32),
            "weight": 0.2 * jax.random.normal(k2, (K, c_out, c_in, kernel_size), jnp.float32),
            "bias": 0.2 * jax.random.normal(k3, (K, c_out), jnp.float32),
            "bn_gamma": jnp.ones((c_out,), jnp.float32),
            "bn_beta": jnp.zeros((c_out,), jnp.float32),
            "bn_mean": jnp.zeros((c_out,), jnp.float32),
            "bn_var": jnp.ones((c_out,), jnp.float32),
        }
        if c_in != c_out:
            p.update({
                "res_w": (1.0 / np.sqrt(c_in)) * jax.random.normal(k4, (c_out, c_in, 1), jnp.float32),
                "res_b": 0.1 * jax.random.normal(k5, (c_out,), jnp.float32),
                "res_bn_gamma": jnp.ones((c_out,), jnp.float32),
                "res_bn_beta": jnp.zeros((c_out,), jnp.float32),
                "res_bn_mean": jnp.zeros((c_out,), jnp.float32),
                "res_bn_var": jnp.ones((c_out,), jnp.float32),
            })
        blocks.append(p)
        c_in = c_out
    return blocks


if __name__ == "__main__":
    key = jax.random.PRNGKey(0)
    in_planes, out_planes = 4, (8, 8)     # block 0 uses res-conv path, block 1 identity path
    kernel_size, dilation, K = 3, 1, 4
    bs, L = 2, 16

    kx, kp = jax.random.split(key)
    x = jax.random.normal(kx, (bs, in_planes, L), jnp.float32)
    params = init_dyconv1d_params(kp, in_planes, out_planes, kernel_size, dilation, K)

    out = dyconv1d_forward(x, params)
    out = jax.block_until_ready(out)

    ref = dyconv1d_reference(x, params)
    np.testing.assert_allclose(np.asarray(out), np.asarray(ref), rtol=5e-2, atol=5e-2)
    print("KERNEL_OK")
</pallas_src>

<mosaic_0001>
module attributes {stable_mosaic.version = 11 : i64} {
  func.func @kernel(%arg0: i32, %arg1: memref<2x4x16xf32, #tpu.memory_space<vmem>>, %arg2: memref<4x4xf32, #tpu.memory_space<vmem>>, %arg3: memref<1x4xf32, #tpu.memory_space<vmem>>, %arg4: memref<4x104xf32, #tpu.memory_space<vmem>>, %arg5: memref<8x1xf32, #tpu.memory_space<vmem>>, %arg6: memref<8x4xf32, #tpu.memory_space<vmem>>, %arg7: memref<8x4xf32, #tpu.memory_space<vmem>>, %arg8: memref<1x4xf32, #tpu.memory_space<vmem>>, %arg9: memref<4x200xf32, #tpu.memory_space<vmem>>, %arg10: memref<8x1xf32, #tpu.memory_space<vmem>>, %arg11: memref<2x8x16xf32, #tpu.memory_space<vmem>>) attributes {dimension_semantics = [#tpu.dimension_semantics<arbitrary>], iteration_bounds = array<i64: 1>, scalar_prefetch = 0 : i64, scratch_operands = 0 : i64, tpu.core_type = #tpu.core_type<tc>, window_params = [{pipeline_mode = #tpu.pipeline_mode<synchronous>, transform_indices = @transform_0, window_bounds = array<i64: 2, 4, 16>}, {pipeline_mode = #tpu.pipeline_mode<synchronous>, transform_indices = @transform_1, window_bounds = array<i64: 4, 4>}, {pipeline_mode = #tpu.pipeline_mode<synchronous>, transform_indices = @transform_2, window_bounds = array<i64: 1, 4>}, {pipeline_mode = #tpu.pipeline_mode<synchronous>, transform_indices = @transform_3, window_bounds = array<i64: 4, 104>}, {pipeline_mode = #tpu.pipeline_mode<synchronous>, transform_indices = @transform_4, window_bounds = array<i64: 8, 1>}, {pipeline_mode = #tpu.pipeline_mode<synchronous>, transform_indices = @transform_5, window_bounds = array<i64: 8, 4>}, {pipeline_mode = #tpu.pipeline_mode<synchronous>, transform_indices = @transform_6, window_bounds = array<i64: 8, 4>}, {pipeline_mode = #tpu.pipeline_mode<synchronous>, transform_indices = @transform_7, window_bounds = array<i64: 1, 4>}, {pipeline_mode = #tpu.pipeline_mode<synchronous>, transform_indices = @transform_8, window_bounds = array<i64: 4, 200>}, {pipeline_mode = #tpu.pipeline_mode<synchronous>, transform_indices = @transform_9, window_bounds = array<i64: 8, 1>}, {pipeline_mode = #tpu.pipeline_mode<synchronous>, transform_indices = @transform_10, window_bounds = array<i64: 2, 8, 16>}]} {
    %c0 = arith.constant 0 : index
    %c0_0 = arith.constant 0 : index
    %c0_1 = arith.constant 0 : index
    %0 = vector.load %arg1[%c0, %c0_0, %c0_1] : memref<2x4x16xf32, #tpu.memory_space<vmem>>, vector<2x4x16xf32>
    %cst = arith.constant dense<0.000000e+00> : vector<2x4xf32>
    %1 = vector.multi_reduction <add>, %0, %cst [2] : vector<2x4x16xf32> to vector<2x4xf32>
    %cst_2 = arith.constant 1.600000e+01 : f32
    %2 = vector.broadcast %cst_2 : f32 to vector<2x4xf32>
    %3 = arith.divf %1, %2 : vector<2x4xf32>
    %c0_3 = arith.constant 0 : index
    %c0_4 = arith.constant 0 : index
    %4 = vector.load %arg2[%c0_3, %c0_4] : memref<4x4xf32, #tpu.memory_space<vmem>>, vector<4x4xf32>
    %cst_5 = arith.constant dense<0.000000e+00> : vector<2x4xf32>
    %5 = tpu.matmul %3, %4, %cst_5 {dimension_numbers = #tpu.dot_dimension_numbers<[1], [0], [0], [1], [0, 0, 1, 1], [], []>} : vector<2x4xf32>, vector<4x4xf32>, vector<2x4xf32> -> vector<2x4xf32>
    %c0_6 = arith.constant 0 : index
    %c0_7 = arith.constant 0 : index
    %6 = vector.load %arg3[%c0_6, %c0_7] : memref<1x4xf32, #tpu.memory_space<vmem>>, vector<1x4xf32>
    %7 = vector.broadcast %6 : vector<1x4xf32> to vector<2x4xf32>
    %8 = arith.addf %5, %7 : vector<2x4xf32>
    %cst_8 = arith.constant dense<0xFF800000> : vector<2xf32>
    %9 = vector.multi_reduction <maximumf>, %8, %cst_8 [1] : vector<2x4xf32> to vector<2xf32>
    %10 = vector.shape_cast %9 : vector<2xf32> to vector<2x1xf32>
    %11 = vector.broadcast %10 : vector<2x1xf32> to vector<2x4xf32>
    %12 = arith.subf %8, %11 : vector<2x4xf32>
    %13 = math.exp %12 : vector<2x4xf32>
    %cst_9 = arith.constant dense<0.000000e+00> : vector<2xf32>
    %14 = vector.multi_reduction <add>, %13, %cst_9 [1] : vector<2x4xf32> to vector<2xf32>
    %15 = vector.shape_cast %14 : vector<2xf32> to vector<2x1xf32>
    %16 = vector.broadcast %15 : vector<2x1xf32> to vector<2x4xf32>
    %17 = arith.divf %13, %16 : vector<2x4xf32>
    %c0_10 = arith.constant 0 : index
    %c0_11 = arith.constant 0 : index
    %18 = vector.load %arg4[%c0_10, %c0_11] : memref<4x104xf32, #tpu.memory_space<vmem>>, vector<4x104xf32>
    %cst_12 = arith.constant dense<0.000000e+00> : vector<2x104xf32>
    %19 = tpu.matmul %17, %18, %cst_12 {dimension_numbers = #tpu.dot_dimension_numbers<[1], [0], [0], [1], [0, 0, 1, 1], [], []>} : vector<2x4xf32>, vector<4x104xf32>, vector<2x104xf32> -> vector<2x104xf32>
    %20 = vector.extract_strided_slice %19 {offsets = [0, 0], sizes = [2, 96], strides = [1, 1]} : vector<2x104xf32> to vector<2x96xf32>
    %21 = vector.shape_cast %20 : vector<2x96xf32> to vector<2x8x12xf32>
    %22 = vector.extract_strided_slice %19 {offsets = [0, 96], sizes = [2, 8], strides = [1, 1]} : vector<2x104xf32> to vector<2x8xf32>
    %23 = tpu.iota {dimensions = array<i32: 2>} : vector<2x4x16xi32>
    %c1_i32 = arith.constant 1 : i32
    %24 = tpu.dynamic_rotate %0 by %c1_i32 dim 2 : vector<2x4x16xf32>, i32 -> vector<2x4x16xf32>
    %c1_i32_13 = arith.constant 1 : i32
    %25 = vector.broadcast %c1_i32_13 : i32 to vector<2x4x16xi32>
    %26 = arith.cmpi sge, %23, %25 : vector<2x4x16xi32>
    %c17_i32 = arith.constant 17 : i32
    %27 = vector.broadcast %c17_i32 : i32 to vector<2x4x16xi32>
    %28 = arith.cmpi slt, %23, %27 : vector<2x4x16xi32>
    %29 = arith.andi %26, %28 : vector<2x4x16xi1>
    %cst_14 = arith.constant 0.000000e+00 : f32
    %30 = vector.broadcast %cst_14 : f32 to vector<2x4x16xf32>
    %31 = arith.select %29, %24, %30 : vector<2x4x16xi1>, vector<2x4x16xf32>
    %c15_i32 = arith.constant 15 : i32
    %32 = tpu.dynamic_rotate %0 by %c15_i32 dim 2 : vector<2x4x16xf32>, i32 -> vector<2x4x16xf32>
    %c-1_i32 = arith.constant -1 : i32
    %33 = vector.broadcast %c-1_i32 : i32 to vector<2x4x16xi32>
    %34 = arith.cmpi sge, %23, %33 : vector<2x4x16xi32>
    %c15_i32_15 = arith.constant 15 : i32
    %35 = vector.broadcast %c15_i32_15 : i32 to vector<2x4x16xi32>
    %36 = arith.cmpi slt, %23, %35 : vector<2x4x16xi32>
    %37 = arith.andi %34, %36 : vector<2x4x16xi1>
    %cst_16 = arith.constant 0.000000e+00 : f32
    %38 = vector.broadcast %cst_16 : f32 to vector<2x4x16xf32>
    %39 = arith.select %37, %32, %38 : vector<2x4x16xi1>, vector<2x4x16xf32>
    %c0_17 = arith.constant 0 : index
    %c0_18 = arith.constant 0 : index
    %40 = vector.load %arg6[%c0_17, %c0_18] : memref<8x4xf32, #tpu.memory_space<vmem>>, vector<8x4xf32>
    %41 = vector.shape_cast %40 : vector<8x4xf32> to vector<1x8x4xf32>
    %42 = vector.shape_cast %41 : vector<1x8x4xf32> to vector<1x8x4xf32>
    %43 = vector.broadcast %42 : vector<1x8x4xf32> to vector<2x8x4xf32>
    %44 = tpu.concatenate %21, %43 in 2 : vector<2x8x12xf32>, vector<2x8x4xf32> -> vector<2x8x16xf32>
    %45 = tpu.concatenate %31, %0, %39, %0 in 1 : vector<2x4x16xf32>, vector<2x4x16xf32>, vector<2x4x16xf32>, vector<2x4x16xf32> -> vector<2x16x16xf32>
    %46 = arith.truncf %44 : vector<2x8x16xf32> to vector<2x8x16xbf16>
    %47 = arith.truncf %45 : vector<2x16x16xf32> to vector<2x16x16xbf16>
    "tpu.trace_start"() <{level = 10 : i32, message = "bof,bfl->bol"}> : () -> ()
    %cst_19 = arith.constant dense<0.000000e+00> : vector<2x8x16xf32>
    %48 = tpu.matmul %46, %47, %cst_19 {dimension_numbers = #tpu.dot_dimension_numbers<[2], [1], [1], [2], [0, 0, 0, 1, 1, 2], [0], [0]>} : vector<2x8x16xbf16>, vector<2x16x16xbf16>, vector<2x8x16xf32> -> vector<2x8x16xf32>
    "tpu.trace_stop"() : () -> ()
    %49 = vector.shape_cast %22 : vector<2x8xf32> to vector<2x8x1xf32>
    %50 = vector.broadcast %49 : vector<2x8x1xf32> to vector<2x8x16xf32>
    %51 = arith.addf %48, %50 : vector<2x8x16xf32>
    %c0_20 = arith.constant 0 : index
    %c0_21 = arith.constant 0 : index
    %52 = vector.load %arg5[%c0_20, %c0_21] : memref<8x1xf32, #tpu.memory_space<vmem>>, vector<8x1xf32>
    %53 = vector.shape_cast %52 : vector<8x1xf32> to vector<1x8x1xf32>
    %54 = vector.broadcast %53 : vector<1x8x1xf32> to vector<2x8x16xf32>
    %55 = arith.addf %51, %54 : vector<2x8x16xf32>
    %cst_22 = arith.constant 0.000000e+00 : f32
    %56 = vector.broadcast %cst_22 : f32 to vector<2x8x16xf32>
    %57 = arith.cmpf ogt, %55, %56 : vector<2x8x16xf32>
    %cst_23 = arith.constant 0.00999999977 : f32
    %58 = vector.broadcast %cst_23 : f32 to vector<2x8x16xf32>
    %59 = arith.mulf %58, %55 : vector<2x8x16xf32>
    %60 = arith.select %57, %55, %59 : vector<2x8x16xi1>, vector<2x8x16xf32>
    %cst_24 = arith.constant dense<0.000000e+00> : vector<2x8xf32>
    %61 = vector.multi_reduction <add>, %60, %cst_24 [2] : vector<2x8x16xf32> to vector<2x8xf32>
    %cst_25 = arith.constant 1.600000e+01 : f32
    %62 = vector.broadcast %cst_25 : f32 to vector<2x8xf32>
    %63 = arith.divf %61, %62 : vector<2x8xf32>
    %c0_26 = arith.constant 0 : index
    %c0_27 = arith.constant 0 : index
    %64 = vector.load %arg7[%c0_26, %c0_27] : memref<8x4xf32, #tpu.memory_space<vmem>>, vector<8x4xf32>
    %cst_28 = arith.constant dense<0.000000e+00> : vector<2x4xf32>
    %65 = tpu.matmul %63, %64, %cst_28 {dimension_numbers = #tpu.dot_dimension_numbers<[1], [0], [0], [1], [0, 0, 1, 1], [], []>} : vector<2x8xf32>, vector<8x4xf32>, vector<2x4xf32> -> vector<2x4xf32>
    %c0_29 = arith.constant 0 : index
    %c0_30 = arith.constant 0 : index
    %66 = vector.load %arg8[%c0_29, %c0_30] : memref<1x4xf32, #tpu.memory_space<vmem>>, vector<1x4xf32>
    %67 = vector.broadcast %66 : vector<1x4xf32> to vector<2x4xf32>
    %68 = arith.addf %65, %67 : vector<2x4xf32>
    %cst_31 = arith.constant dense<0xFF800000> : vector<2xf32>
    %69 = vector.multi_reduction <maximumf>, %68, %cst_31 [1] : vector<2x4xf32> to vector<2xf32>
    %70 = vector.shape_cast %69 : vector<2xf32> to vector<2x1xf32>
    %71 = vector.broadcast %70 : vector<2x1xf32> to vector<2x4xf32>
    %72 = arith.subf %68, %71 : vector<2x4xf32>
    %73 = math.exp %72 : vector<2x4xf32>
    %cst_32 = arith.constant dense<0.000000e+00> : vector<2xf32>
    %74 = vector.multi_reduction <add>, %73, %cst_32 [1] : vector<2x4xf32> to vector<2xf32>
    %75 = vector.shape_cast %74 : vector<2xf32> to vector<2x1xf32>
    %76 = vector.broadcast %75 : vector<2x1xf32> to vector<2x4xf32>
    %77 = arith.divf %73, %76 : vector<2x4xf32>
    %c0_33 = arith.constant 0 : index
    %c0_34 = arith.constant 0 : index
    %78 = vector.load %arg9[%c0_33, %c0_34] : memref<4x200xf32, #tpu.memory_space<vmem>>, vector<4x200xf32>
    %cst_35 = arith.constant dense<0.000000e+00> : vector<2x200xf32>
    %79 = tpu.matmul %77, %78, %cst_35 {dimension_numbers = #tpu.dot_dimension_numbers<[1], [0], [0], [1], [0, 0, 1, 1], [], []>} : vector<2x4xf32>, vector<4x200xf32>, vector<2x200xf32> -> vector<2x200xf32>
    %80 = vector.extract_strided_slice %79 {offsets = [0, 0], sizes = [2, 192], strides = [1, 1]} : vector<2x200xf32> to vector<2x192xf32>
    %81 = vector.shape_cast %80 : vector<2x192xf32> to vector<2x8x24xf32>
    %82 = vector.extract_strided_slice %79 {offsets = [0, 192], sizes = [2, 8], strides = [1, 1]} : vector<2x200xf32> to vector<2x8xf32>
    %83 = tpu.iota {dimensions = array<i32: 2>} : vector<2x8x16xi32>
    %c1_i32_36 = arith.constant 1 : i32
    %84 = tpu.dynamic_rotate %60 by %c1_i32_36 dim 2 : vector<2x8x16xf32>, i32 -> vector<2x8x16xf32>
    %c1_i32_37 = arith.constant 1 : i32
    %85 = vector.broadcast %c1_i32_37 : i32 to vector<2x8x16xi32>
    %86 = arith.cmpi sge, %83, %85 : vector<2x8x16xi32>
    %c17_i32_38 = arith.constant 17 : i32
    %87 = vector.broadcast %c17_i32_38 : i32 to vector<2x8x16xi32>
    %88 = arith.cmpi slt, %83, %87 : vector<2x8x16xi32>
    %89 = arith.andi %86, %88 : vector<2x8x16xi1>
    %cst_39 = arith.constant 0.000000e+00 : f32
    %90 = vector.broadcast %cst_39 : f32 to vector<2x8x16xf32>
    %91 = arith.select %89, %84, %90 : vector<2x8x16xi1>, vector<2x8x16xf32>
    %c15_i32_40 = arith.constant 15 : i32
    %92 = tpu.dynamic_rotate %60 by %c15_i32_40 dim 2 : vector<2x8x16xf32>, i32 -> vector<2x8x16xf32>
    %c-1_i32_41 = arith.constant -1 : i32
    %93 = vector.broadcast %c-1_i32_41 : i32 to vector<2x8x16xi32>
    %94 = arith.cmpi sge, %83, %93 : vector<2x8x16xi32>
    %c15_i32_42 = arith.constant 15 : i32
    %95 = vector.broadcast %c15_i32_42 : i32 to vector<2x8x16xi32>
    %96 = arith.cmpi slt, %83, %95 : vector<2x8x16xi32>
    %97 = arith.andi %94, %96 : vector<2x8x16xi1>
    %cst_43 = arith.constant 0.000000e+00 : f32
    %98 = vector.broadcast %cst_43 : f32 to vector<2x8x16xf32>
    %99 = arith.select %97, %92, %98 : vector<2x8x16xi1>, vector<2x8x16xf32>
    %100 = tpu.concatenate %91, %60, %99 in 1 : vector<2x8x16xf32>, vector<2x8x16xf32>, vector<2x8x16xf32> -> vector<2x24x16xf32>
    %101 = arith.truncf %81 : vector<2x8x24xf32> to vector<2x8x24xbf16>
    %102 = arith.truncf %100 : vector<2x24x16xf32> to vector<2x24x16xbf16>
    "tpu.trace_start"() <{level = 10 : i32, message = "bof,bfl->bol"}> : () -> ()
    %cst_44 = arith.constant dense<0.000000e+00> : vector<2x8x16xf32>
    %103 = tpu.matmul %101, %102, %cst_44 {dimension_numbers = #tpu.dot_dimension_numbers<[2], [1], [1], [2], [0, 0, 0, 1, 1, 2], [0], [0]>} : vector<2x8x24xbf16>, vector<2x24x16xbf16>, vector<2x8x16xf32> -> vector<2x8x16xf32>
    "tpu.trace_stop"() : () -> ()
    %104 = vector.shape_cast %82 : vector<2x8xf32> to vector<2x8x1xf32>
    %105 = vector.broadcast %104 : vector<2x8x1xf32> to vector<2x8x16xf32>
    %106 = arith.addf %103, %105 : vector<2x8x16xf32>
    %c0_45 = arith.constant 0 : index
    %c0_46 = arith.constant 0 : index
    %107 = vector.load %arg10[%c0_45, %c0_46] : memref<8x1xf32, #tpu.memory_space<vmem>>, vector<8x1xf32>
    %108 = vector.shape_cast %107 : vector<8x1xf32> to vector<1x8x1xf32>
    %109 = vector.broadcast %108 : vector<1x8x1xf32> to vector<2x8x16xf32>
    %110 = arith.addf %106, %109 : vector<2x8x16xf32>
    %111 = arith.addf %110, %60 : vector<2x8x16xf32>
    %cst_47 = arith.constant 0.000000e+00 : f32
    %112 = vector.broadcast %cst_47 : f32 to vector<2x8x16xf32>
    %113 = arith.cmpf ogt, %111, %112 : vector<2x8x16xf32>
    %cst_48 = arith.constant 0.00999999977 : f32
    %114 = vector.broadcast %cst_48 : f32 to vector<2x8x16xf32>
    %115 = arith.mulf %114, %111 : vector<2x8x16xf32>
    %116 = arith.select %113, %111, %115 : vector<2x8x16xi1>, vector<2x8x16xf32>
    %c0_49 = arith.constant 0 : index
    %c0_50 = arith.constant 0 : index
    %c0_51 = arith.constant 0 : index
    %117 = vector.load %arg11[%c0_49, %c0_50, %c0_51] : memref<2x8x16xf32, #tpu.memory_space<vmem>>, vector<2x8x16xf32>
    tpu.vector_store %arg11[%c0_49, %c0_50, %c0_51], %116 {strides = array<i32>} : memref<2x8x16xf32, #tpu.memory_space<vmem>>, vector<2x8x16xf32>,
    return
  }
  func.func @transform_0(%arg0: i32) -> (i32, i32, i32) {
    %c0_i32 = arith.constant 0 : i32
    %c0_i32_0 = arith.constant 0 : i32
    %c0_i32_1 = arith.constant 0 : i32
    %c0_i32_2 = arith.constant 0 : i32
    return %c0_i32, %c0_i32_0, %c0_i32_1 : i32, i32, i32
  }
  func.func @transform_1(%arg0: i32) -> (i32, i32) {
    %c0_i32 = arith.constant 0 : i32
    %c0_i32_0 = arith.constant 0 : i32
    %c0_i32_1 = arith.constant 0 : i32
    return %c0_i32, %c0_i32_0 : i32, i32
  }
  func.func @transform_2(%arg0: i32) -> (i32, i32) {
    %c0_i32 = arith.constant 0 : i32
    %c0_i32_0 = arith.constant 0 : i32
    %c0_i32_1 = arith.constant 0 : i32
    return %c0_i32, %c0_i32_0 : i32, i32
  }
  func.func @transform_3(%arg0: i32) -> (i32, i32) {
    %c0_i32 = arith.constant 0 : i32
    %c0_i32_0 = arith.constant 0 : i32
    %c0_i32_1 = arith.constant 0 : i32
    return %c0_i32, %c0_i32_0 : i32, i32
  }
  func.func @transform_4(%arg0: i32) -> (i32, i32) {
    %c0_i32 = arith.constant 0 : i32
    %c0_i32_0 = arith.constant 0 : i32
    %c0_i32_1 = arith.constant 0 : i32
    return %c0_i32, %c0_i32_0 : i32, i32
  }
  func.func @transform_5(%arg0: i32) -> (i32, i32) {
    %c0_i32 = arith.constant 0 : i32
    %c0_i32_0 = arith.constant 0 : i32
    %c0_i32_1 = arith.constant 0 : i32
    return %c0_i32, %c0_i32_0 : i32, i32
  }
  func.func @transform_6(%arg0: i32) -> (i32, i32) {
    %c0_i32 = arith.constant 0 : i32
    %c0_i32_0 = arith.constant 0 : i32
    %c0_i32_1 = arith.constant 0 : i32
    return %c0_i32, %c0_i32_0 : i32, i32
  }
  func.func @transform_7(%arg0: i32) -> (i32, i32) {
    %c0_i32 = arith.constant 0 : i32
    %c0_i32_0 = arith.constant 0 : i32
    %c0_i32_1 = arith.constant 0 : i32
    return %c0_i32, %c0_i32_0 : i32, i32
  }
  func.func @transform_8(%arg0: i32) -> (i32, i32) {
    %c0_i32 = arith.constant 0 : i32
    %c0_i32_0 = arith.constant 0 : i32
    %c0_i32_1 = arith.constant 0 : i32
    return %c0_i32, %c0_i32_0 : i32, i32
  }
  func.func @transform_9(%arg0: i32) -> (i32, i32) {
    %c0_i32 = arith.constant 0 : i32
    %c0_i32_0 = arith.constant 0 : i32
    %c0_i32_1 = arith.constant 0 : i32
    return %c0_i32, %c0_i32_0 : i32, i32
  }
  func.func @transform_10(%arg0: i32) -> (i32, i32, i32) {
    %c0_i32 = arith.constant 0 : i32
    %c0_i32_0 = arith.constant 0 : i32
    %c0_i32_1 = arith.constant 0 : i32
    %c0_i32_2 = arith.constant 0 : i32
    return %c0_i32, %c0_i32_0, %c0_i32_1 : i32, i32, i32
  }
}

</mosaic_0001>

<llo_original>
// kernel: tpu_custom_call.1
$region0: #{tpu_custom_call.1}
  #allocation0 [shape = 'u32[]', space=smem, size = 0x4, offset = 0x4, fixed_abs, tag = 'smem constant byte address 0x4 - core index']
  #allocation1 [shape = 'u32[72,128]{1,0:T(1,128)}', space=vmem, size = 0x9000, scoped, tag = 'internal scratch']
  %s0 = inlined_call_operand.vmem [shape: f32[2,4,16], index: 0, kind: input, shape index: {}]
  %s1 = inlined_call_operand.vmem [shape: f32[4,4], index: 1, kind: input, shape index: {}]
  %s2 = inlined_call_operand.vmem [shape: f32[1,4], index: 2, kind: input, shape index: {}]
  %s3 = inlined_call_operand.vmem [shape: f32[4,104], index: 3, kind: input, shape index: {}]
  %s4 = inlined_call_operand.vmem [shape: f32[8,1], index: 4, kind: input, shape index: {}]
  %s5 = inlined_call_operand.vmem [shape: f32[8,4], index: 5, kind: input, shape index: {}]
  %s6 = inlined_call_operand.vmem [shape: f32[8,4], index: 6, kind: input, shape index: {}]
  %s7 = inlined_call_operand.vmem [shape: f32[1,4], index: 7, kind: input, shape index: {}]
  %s8 = inlined_call_operand.vmem [shape: f32[4,200], index: 8, kind: input, shape index: {}]
  %s9 = inlined_call_operand.vmem [shape: f32[8,1], index: 9, kind: input, shape index: {}]
  %s10 = inlined_call_operand.hbm [shape: f32[2,8,16], index: 10, kind: output, shape index: {}]
  %s11 = sld [smem:[#allocation0]]
  $region50: #{tpu_custom_call.1} parent=0
    _
  %s13 = ssub.s32 1, %s11
  %s14 = scalar_select 0, %s13, %s11
  $region1: #{tpu_custom_call.1} parent=0
    #allocation2 [shape = 'u8[8192]{0}', space=vmem, size = 0x2000, scoped, tag = 'output window, operand 0, single buffered']
    #allocation3 [shape = 's32[1]{0}', space=sflag, size = 0x4, scoped, tag = 'scoped memory for tpu_custom_call.1']
    %15 = vsyncpa [#allocation3], 0
    // Predicated region
    $region2: #{tpu_custom_call.1} parent=1 // pred_check
      _
    $region3: #{tpu_custom_call.1} parent=1 // pred_check_branch
      %17 = sbr.rel (0) target = $region5
    $region4: #{tpu_custom_call.1} parent=1 // pred_region
      _
    $region5: #{tpu_custom_call.1} parent=1 // pred_fallthru
      _
    // Predicated region
    $region6: #{tpu_custom_call.1} parent=1 // pred_check
      _
    $region7: #{tpu_custom_call.1} parent=1 // pred_check_branch
      %19 = sbr.rel (0) target = $region9
    $region8: #{tpu_custom_call.1} parent=1 // pred_region
      _
    $region9: #{tpu_custom_call.1} parent=1 // pred_fallthru
      _
    // Predicated region
    $region10: #{tpu_custom_call.1} parent=1 // pred_check
      _
    $region11: #{tpu_custom_call.1} parent=1 // pred_check_branch
      %21 = sbr.rel (0) target = $region13
    $region12: #{tpu_custom_call.1} parent=1 // pred_region
      _
    $region13: #{tpu_custom_call.1} parent=1 // pred_fallthru
      _
    // Predicated region
    $region14: #{tpu_custom_call.1} parent=1 // pred_check
      _
    $region15: #{tpu_custom_call.1} parent=1 // pred_check_branch
      %23 = sbr.rel (0) target = $region17
    $region16: #{tpu_custom_call.1} parent=1 // pred_region
      _
    $region17: #{tpu_custom_call.1} parent=1 // pred_fallthru
      _
    // Predicated region
    $region18: #{tpu_custom_call.1} parent=1 // pred_check
      _
    $region19: #{tpu_custom_call.1} parent=1 // pred_check_branch
      %25 = sbr.rel (0) target = $region21
    $region20: #{tpu_custom_call.1} parent=1 // pred_region
      _
    $region21: #{tpu_custom_call.1} parent=1 // pred_fallthru
      _
    // Predicated region
    $region22: #{tpu_custom_call.1} parent=1 // pred_check
      _
    $region23: #{tpu_custom_call.1} parent=1 // pred_check_branch
      %27 = sbr.rel (0) target = $region25
    $region24: #{tpu_custom_call.1} parent=1 // pred_region
      _
    $region25: #{tpu_custom_call.1} parent=1 // pred_fallthru
      _
    // Predicated region
    $region26: #{tpu_custom_call.1} parent=1 // pred_check
      _
    $region27: #{tpu_custom_call.1} parent=1 // pred_check_branch
      %29 = sbr.rel (0) target = $region29
    $region28: #{tpu_custom_call.1} parent=1 // pred_region
      _
    $region29: #{tpu_custom_call.1} parent=1 // pred_fallthru
      _
    // Predicated region
    $region30: #{tpu_custom_call.1} parent=1 // pred_check
      _
    $region31: #{tpu_custom_call.1} parent=1 // pred_check_branch
      %31 = sbr.rel (0) target = $region33
    $region32: #{tpu_custom_call.1} parent=1 // pred_region
      _
    $region33: #{tpu_custom_call.1} parent=1 // pred_fallthru
      _
    // Predicated region
    $region34: #{tpu_custom_call.1} parent=1 // pred_check
      _
    $region35: #{tpu_custom_call.1} parent=1 // pred_check_branch
      %33 = sbr.rel (0) target = $region37
    $region36: #{tpu_custom_call.1} parent=1 // pred_region
      _
    $region37: #{tpu_custom_call.1} parent=1 // pred_fallthru
      _
    // Predicated region
    $region38: #{tpu_custom_call.1} parent=1 // pred_check
      _
    $region39: #{tpu_custom_call.1} parent=1 // pred_check_branch
      %35 = sbr.rel (0) target = $region41
    $region40: #{tpu_custom_call.1} parent=1 // pred_region
      _
    $region41: #{tpu_custom_call.1} parent=1 // pred_fallthru
      _
    %v37 = vld [vmem:[%s0] sm:$0xf]
    %v38 = vld [vmem:[%s0 + $0x4] sm:$0xf]
    %vm39 = vcmask 125952
    %v40 = vsel %vm39, %v37, 0.0
    %41 = vadd.xlane.f32.xlu0 %v40
    %v42 = vpop.xlane.xlu0 %41
    %v43 = vsel %vm39, %v38, 0.0
    %44 = vadd.xlane.f32.xlu0 %v43
    %v45 = vpop.xlane.xlu0 %44
    %v46 = vrcp.pop 16.0
    %v47 = vmul.f32 16.0, %v46
    %v48 = vsub.f32 1.0, %v47
    %v49 = vmul.f32 %v46, %v48
    %v50 = vadd.f32 %v46, %v49
    %vm51 = vweird.f32 %v46
    %v52 = vsel %vm51, %v46, %v50
    %v53 = vmul.f32 %v42, %v52
    %v54 = vmul.f32 %v45, %v52
    %v55 = vld [vmem:[%s1] sm:$0xf]
    %v56 = vld [vmem:[%s2] sm:$0x1]
    %v58 = vperm.slane %v56, 0
    %v62 = vlaneseq
    %v63 = vand.u32 %v62, 127
    %v64 = vperm.slane %v53, %v63
    %v65 = vperm.slane %v54, %v63
    %vm66 = vcmask 1041409
    %v67 = vsel %vm66, %v65, %v64
    %vm68 = vcmask 31744
    %v69 = vsel %vm68, %v67, 0
    %vm71 = vcmask 1043456
    %v73 = vsel %vm71, %v55, 0
    %75 = vmatpush.msra.mxu0 0.0
    %76 = vmatpush.msra.mxu0 0.0
    %77 = vmatpush.msra.mxu0 0.0
    %78 = vmatpush.msra.mxu0 0.0
    %79 = vmatpush.msra.mxu0 0.0
    %80 = vmatpush.msra.mxu0 0.0
    %81 = vmatpush.msra.mxu0 0.0
    %82 = vmatpush.msra.mxu0 0.0
    %83 = vmatpush.msra.mxu0 0.0
    %84 = vmatpush.msra.mxu0 0.0
    %85 = vmatpush.msra.mxu0 0.0
    %86 = vmatpush.msra.mxu0 0.0
    %87 = vmatpush.msra.mxu0 0.0
    %88 = vmatpush.msra.mxu0 0.0
    %89 = vmatpush.msra.mxu0 0.0
    %90 = vmatpush.msra.mxu0 %v73
    %91 = vmatmul.f32.gmra.mxu0 %v69
    %v92 = vpop.f32.mrf.mxu0
    %v93 = vadd.f32 %v58, %v92
    %94 = vdwg.mxu0
    %vm95 = vcmask 25600
    %v96 = vsel %vm95, %v93, -inf
    %97 = vmax.xlane.f32.xlu0 %v96
    %v98 = vpop.xlane.xlu0 %97
    %v99 = vsub.f32 %v93, %v98
    %v100 = vmul.f32 %v99, 1.442695
    %v101 = vpow.pop %v100
    %v102 = vsel %vm95, %v101, 0.0
    %103 = vadd.xlane.f32.xlu0 %v102
    %v104 = vpop.xlane.xlu0 %103
    %v105 = vrcp.pop %v104
    %v106 = vmul.f32 %v104, %v105
    %v107 = vsub.f32 1.0, %v106
    %v108 = vmul.f32 %v105, %v107
    %v109 = vadd.f32 %v105, %v108
    %vm110 = vweird.f32 %v104
    %vm111 = vweird.f32 %v105
    %vm112 = vmor %vm110, %vm111
    %v113 = vsel %vm112, %v105, %v109
    %v114 = vand.u32 2147483647, %v104
    %vm115 = vcmp.eq.f32.partialorder %v114, 8.507059e+37
    %v116 = vand.u32 %v104, 2147483648
    %v117 = vor.u32 1.1754944e-38, %v116
    %v118 = vsel %vm115, %v117, %v113
    %v119 = vmul.f32 %v101, %v118
    %v120 = vld [vmem:[%s3] sm:$0xf]
    %v122 = vsel %vm68, %v119, 0
    %v125 = vsel %vm71, %v120, 0
    %127 = vmatpush.msra.mxu0 0.0
    %128 = vmatpush.msra.mxu0 0.0
    %129 = vmatpush.msra.mxu0 0.0
    %130 = vmatpush.msra.mxu0 0.0
    %131 = vmatpush.msra.mxu0 0.0
    %132 = vmatpush.msra.mxu0 0.0
    %133 = vmatpush.msra.mxu0 0.0
    %134 = vmatpush.msra.mxu0 0.0
    %135 = vmatpush.msra.mxu0 0.0
    %136 = vmatpush.msra.mxu0 0.0
    %137 = vmatpush.msra.mxu0 0.0
    %138 = vmatpush.msra.mxu0 0.0
    %139 = vmatpush.msra.mxu0 0.0
    %140 = vmatpush.msra.mxu0 0.0
    %141 = vmatpush.msra.mxu0 0.0
    %142 = vmatpush.msra.mxu0 %v125
    %143 = vmatmul.f32.gmra.mxu0 %v122
    %v144 = vpop.f32.mrf.mxu0
    %v145 = vadd.f32 0.0, %v144
    %146 = vdwg.mxu0
    %148 = vrot.lane.b32.xlu0 %v145, 116
    %v149 = vpop.permute.xlu0 %148
    %151 = vrot.lane.b32.xlu0 %v145, 104
    %v152 = vpop.permute.xlu0 %151
    %154 = vrot.lane.b32.xlu0 %v145, 92
    %v155 = vpop.permute.xlu0 %154
    %157 = vrot.lane.b32.xlu0 %v145, 80
    %v158 = vpop.permute.xlu0 %157
    %160 = vrot.lane.b32.xlu0 %v145, 68
    %v161 = vpop.permute.xlu0 %160
    %163 = vrot.lane.b32.xlu0 %v145, 56
    %v164 = vpop.permute.xlu0 %163
    %166 = vrot.lane.b32.xlu0 %v145, 44
    %v167 = vpop.permute.xlu0 %166
    %v169 = vrot.slane %v152, 4
    %vm170 = vcmask 1047556
    %v171 = vsel %vm170, %v169, %v145
    %v173 = vunpack.c.l.s4 1983009808
    %v174 = vunpack.c.0.s8 %v173
    %v175 = vperm.slane %v171, %v174
    %v176 = vrot.slane %v155, 4
    %v177 = vsel %vm170, %v176, %v149
    %v179 = vunpack.c.l.s4 1983009808
    %v180 = vunpack.c.0.s8 %v179
    %v181 = vperm.slane %v177, %v180
    %v182 = vrot.slane %v164, 4
    %v183 = vsel %vm170, %v182, %v158
    %v185 = vunpack.c.l.s4 1983009808
    %v186 = vunpack.c.0.s8 %v185
    %v187 = vperm.slane %v183, %v186
    %v188 = vrot.slane %v167, 4
    %v189 = vsel %vm170, %v188, %v161
    %v191 = vunpack.c.l.s4 1983009808
    %v192 = vunpack.c.0.s8 %v191
    %v193 = vperm.slane %v189, %v192
    %v194 = vrot.slane %v181, 4
    %v195 = vsel %vm170, %v194, %v175
    %v197 = vunpack.c.l.s4 1934713408
    %v198 = vunpack.c.0.s8 %v197
    %v199 = vperm.slane %v195, %v198
    %v200 = vrot.slane %v193, 4
    %v201 = vsel %vm170, %v200, %v187
    %v203 = vunpack.c.l.s4 1934713408
    %v204 = vunpack.c.0.s8 %v203
    %v205 = vperm.slane %v201, %v204
    %v206 = vrot.slane %v205, 4
    %v207 = vsel %vm170, %v206, %v199
    %v208 = vrot.slane %v199, 4
    %v209 = vsel %vm170, %v205, %v208
    %vm210 = vcmask 1047680
    %211 = vrot.lane.b32.xlu0 %v37, 16
    %v212 = vpop.permute.xlu0 %211
    %v213 = vsel %vm210, %v212, %v37
    %214 = vrot.lane.b32.xlu0 %v38, 16
    %v215 = vpop.permute.xlu0 %214
    %v216 = vsel %vm210, %v215, %v38
    %217 = vrot.lane.b32.xlu0 %v213, 16
    %v218 = vpop.permute.xlu0 %217
    %219 = vrot.lane.b32.xlu0 %v216, 16
    %v220 = vpop.permute.xlu0 %219
    %v221 = vsel %vm210, %v218, %v37
    %v222 = vsel %vm210, %v220, %v38
    %vm223 = vcmp.ge.s32.totalorder %v63, 1
    %vm224 = vcmp.lt.s32.totalorder %v63, 17
    %vm225 = vmand %vm223, %vm224
    %228 = vrot.lane.b32.xlu0 %v221, 113
    %v229 = vpop.permute.xlu0 %228
    %230 = vrot.lane.b32.xlu0 %v222, 113
    %v231 = vpop.permute.xlu0 %230
    %v234 = vsel %vm225, %v229, 0.0
    %v235 = vsel %vm225, %v231, 0.0
    %vm236 = vcmp.ge.s32.totalorder %v63, 4294967295
    %vm237 = vcmp.lt.s32.totalorder %v63, 15
    %vm238 = vmand %vm236, %vm237
    %239 = vrot.lane.b32.xlu0 %v221, 127
    %v240 = vpop.permute.xlu0 %239
    %241 = vrot.lane.b32.xlu0 %v222, 127
    %v242 = vpop.permute.xlu0 %241
    %v245 = vsel %vm238, %v240, 0.0
    %v246 = vsel %vm238, %v242, 0.0
    %v247 = vld [vmem:[%s5] sm:$0xff]
    %249 = vrot.lane.b32.xlu0 %v247, 12
    %v250 = vpop.permute.xlu0 %249
    %vm252 = vcmask 97280
    %v253 = vsel %vm252, %v207, %v250
    %v254 = vsel %vm252, %v209, %v250
    %v257 = vrot.slane %v37, 4
    %v258 = vrot.slane %v38, 4
    %v261 = vsel %vm71, %v234, %v257
    %v262 = vsel %vm71, %v235, %v258
    %v263 = vsel %vm71, %v245, %v257
    %v264 = vsel %vm71, %v246, %v258
    %v265 = vpack.c.bf16 %v253, %v253
    %v266 = vpack.c.bf16 %v254, %v254
    %v267 = vpack.c.bf16 %v261, %v261
    %v268 = vpack.c.bf16 %v263, %v263
    %v269 = vpack.c.bf16 %v262, %v262
    %v270 = vpack.c.bf16 %v264, %v264
    %v271 = vperm.slane %v145, 0
    %v272 = vlaneseq
    %v273 = vshrl.u32 %v272, 7
    %v274 = vadd.s32 %v273, 96
    %275 = vset.pattern.permute.xlu0 %v274
    %276 = vperm.xlu0 %275, %v271
    %v277 = vpop.permute.xlu0 %276
    %v278 = vperm.slane %v145, 1
    %v279 = vlaneseq
    %v280 = vshrl.u32 %v279, 7
    %v281 = vadd.s32 %v280, 96
    %282 = vset.pattern.permute.xlu0 %v281
    %283 = vperm.xlu0 %282, %v278
    %v284 = vpop.permute.xlu0 %283
    %v287 = vunpack.c.l.b16 %v267
    %v288 = vunpack.c.l.b16 %v268
    %v289 = vpack.c.b16 %v288, %v287
    %vm291 = vcmask 130048
    %v293 = vsel %vm291, %v265, 0
    %295 = vmatpush.bf16.msra.mxu0 0
    %296 = vmatpush.bf16.msra.mxu0 0
    %297 = vmatpush.bf16.msra.mxu0 0
    %298 = vmatpush.bf16.msra.mxu0 0
    %299 = vmatpush.bf16.msra.mxu0 0
    %300 = vmatpush.bf16.msra.mxu0 0
    %301 = vmatpush.bf16.msra.mxu0 0
    %302 = vmatpush.bf16.msra.mxu0 %v289
    %303 = vmatmul.bf16.gmra.mxu0 %v293
    %v304 = vpop.f32.mrf.mxu0
    %v305 = vadd.f32 %v277, %v304
    %v306 = vpop.f32.mrf.mxu0
    %307 = vdwg.mxu0
    %v310 = vunpack.c.l.b16 %v269
    %v311 = vunpack.c.l.b16 %v270
    %v312 = vpack.c.b16 %v311, %v310
    %v315 = vsel %vm291, %v266, 0
    %317 = vmatpush.bf16.msra.mxu0 0
    %318 = vmatpush.bf16.msra.mxu0 0
    %319 = vmatpush.bf16.msra.mxu0 0
    %320 = vmatpush.bf16.msra.mxu0 0
    %321 = vmatpush.bf16.msra.mxu0 0
    %322 = vmatpush.bf16.msra.mxu0 0
    %323 = vmatpush.bf16.msra.mxu0 0
    %324 = vmatpush.bf16.msra.mxu0 %v312
    %325 = vmatmul.bf16.gmra.mxu0 %v315
    %v326 = vpop.f32.mrf.mxu0
    %v327 = vadd.f32 %v284, %v326
    %v328 = vpop.f32.mrf.mxu0
    %329 = vdwg.mxu0
    %v330 = vld [vmem:[%s4] sm:$0xff]
    %332 = vset.pattern.permute.xlu0 0
    %333 = vperm.xlu0 %332, %v330
    %v334 = vpop.permute.xlu0 %333
    %v336 = vadd.f32 %v305, %v334
    %v337 = vadd.f32 %v327, %v334
    %vm338 = vcmp.gt.f32.partialorder %v336, 0.0
    %vm339 = vcmp.gt.f32.partialorder %v337, 0.0
    %v340 = vmul.f32 %v336, 0.01
    %v341 = vmul.f32 %v337, 0.01
    %v342 = vsel %vm338, %v336, %v340
    %v343 = vsel %vm339, %v337, %v341
    %v344 = vsel %vm291, %v342, 0.0
    %345 = vadd.xlane.f32.xlu0 %v344
    %v346 = vpop.xlane.xlu0 %345
    %v347 = vsel %vm291, %v343, 0.0
    %348 = vadd.xlane.f32.xlu0 %v347
    %v349 = vpop.xlane.xlu0 %348
    %v350 = vmul.f32 %v346, %v52
    %v351 = vmul.f32 %v349, %v52
    %v352 = vld [vmem:[%s6] sm:$0xff]
    %v353 = vld [vmem:[%s7] sm:$0x1]
    %v355 = vperm.slane %v353, 0
    %v359 = vperm.slane %v350, %v63
    %v360 = vperm.slane %v351, %v63
    %v361 = vsel %vm66, %v360, %v359
    %vm362 = vcmask 64512
    %v363 = vsel %vm362, %v361, 0
    %365 = vmatpush.msra.mxu0 0.0
    %366 = vmatpush.msra.mxu0 0.0
    %367 = vmatpush.msra.mxu0 0.0
    %368 = vmatpush.msra.mxu0 0.0
    %369 = vmatpush.msra.mxu0 0.0
    %370 = vmatpush.msra.mxu0 0.0
    %371 = vmatpush.msra.mxu0 0.0
    %372 = vmatpush.msra.mxu0 0.0
    %373 = vmatpush.msra.mxu0 0.0
    %374 = vmatpush.msra.mxu0 0.0
    %375 = vmatpush.msra.mxu0 0.0
    %376 = vmatpush.msra.mxu0 0.0
    %377 = vmatpush.msra.mxu0 0.0
    %378 = vmatpush.msra.mxu0 0.0
    %379 = vmatpush.msra.mxu0 0.0
    %380 = vmatpush.msra.mxu0 %v352
    %381 = vmatmul.f32.gmra.mxu0 %v363
    %v382 = vpop.f32.mrf.mxu0
    %v383 = vadd.f32 %v355, %v382
    %384 = vdwg.mxu0
    %v385 = vsel %vm95, %v383, -inf
    %386 = vmax.xlane.f32.xlu0 %v385
    %v387 = vpop.xlane.xlu0 %386
    %v388 = vsub.f32 %v383, %v387
    %v389 = vmul.f32 %v388, 1.442695
    %v390 = vpow.pop %v389
    %v391 = vsel %vm95, %v390, 0.0
    %392 = vadd.xlane.f32.xlu0 %v391
    %v393 = vpop.xlane.xlu0 %392
    %v394 = vrcp.pop %v393
    %v395 = vmul.f32 %v393, %v394
    %v396 = vsub.f32 1.0, %v395
    %v397 = vmul.f32 %v394, %v396
    %v398 = vadd.f32 %v394, %v397
    %vm399 = vweird.f32 %v393
    %vm400 = vweird.f32 %v394
    %vm401 = vmor %vm399, %vm400
    %v402 = vsel %vm401, %v394, %v398
    %v403 = vand.u32 2147483647, %v393
    %vm404 = vcmp.eq.f32.partialorder %v403, 8.507059e+37
    %v405 = vand.u32 %v393, 2147483648
    %v406 = vor.u32 1.1754944e-38, %v405
    %v407 = vsel %vm404, %v406, %v402
    %v408 = vmul.f32 %v390, %v407
    %v409 = vld [vmem:[%s8] sm:$0xff]
    %411 = vst [vmem:[#allocation1] ss:$2 sm:$0xff] %v409
    %v412 = vld.sshfl [vmem:[#allocation1] sm:$0xff pattern:$0x75316420]
    %v413 = vld.sshfl [vmem:[#allocation1 + $0x8] sm:$0xff pattern:$0x75316420]
    %v415 = vsel %vm68, %v408, 0
    %v417 = vsel %vm71, %v412, 0
    %v419 = vsel %vm71, %v413, 0
    %421 = vmatpush.msra.mxu0 0.0
    %422 = vmatpush.msra.mxu0 0.0
    %423 = vmatpush.msra.mxu0 0.0
    %424 = vmatpush.msra.mxu0 0.0
    %425 = vmatpush.msra.mxu0 0.0
    %426 = vmatpush.msra.mxu0 0.0
    %427 = vmatpush.msra.mxu0 0.0
    %428 = vmatpush.msra.mxu0 0.0
    %429 = vmatpush.msra.mxu0 0.0
    %430 = vmatpush.msra.mxu0 0.0
    %431 = vmatpush.msra.mxu0 0.0
    %432 = vmatpush.msra.mxu0 0.0
    %433 = vmatpush.msra.mxu0 0.0
    %434 = vmatpush.msra.mxu0 0.0
    %435 = vmatpush.msra.mxu0 0.0
    %436 = vmatpush.msra.mxu0 %v417
    %437 = vmatmul.f32.gmra.mxu0 %v415
    %v438 = vpop.f32.mrf.mxu0
    %v439 = vadd.f32 0.0, %v438
    %440 = vdwg.mxu0
    %441 = vmatpush.msra.mxu0 0.0
    %442 = vmatpush.msra.mxu0 0.0
    %443 = vmatpush.msra.mxu0 0.0
    %444 = vmatpush.msra.mxu0 0.0
    %445 = vmatpush.msra.mxu0 0.0
    %446 = vmatpush.msra.mxu0 0.0
    %447 = vmatpush.msra.mxu0 0.0
    %448 = vmatpush.msra.mxu0 0.0
    %449 = vmatpush.msra.mxu0 0.0
    %450 = vmatpush.msra.mxu0 0.0
    %451 = vmatpush.msra.mxu0 0.0
    %452 = vmatpush.msra.mxu0 0.0
    %453 = vmatpush.msra.mxu0 0.0
    %454 = vmatpush.msra.mxu0 0.0
    %455 = vmatpush.msra.mxu0 0.0
    %456 = vmatpush.msra.mxu0 %v419
    %457 = vmatmul.f32.gmra.mxu0 %v415
    %v458 = vpop.f32.mrf.mxu0
    %v459 = vadd.f32 0.0, %v458
    %460 = vdwg.mxu0
    %462 = vrot.lane.b32.xlu0 %v439, 104
    %v463 = vpop.permute.xlu0 %462
    %465 = vrot.lane.b32.xlu0 %v439, 80
    %v466 = vpop.permute.xlu0 %465
    %468 = vrot.lane.b32.xlu0 %v439, 56
    %v469 = vpop.permute.xlu0 %468
    %471 = vrot.lane.b32.xlu0 %v439, 32
    %v472 = vpop.permute.xlu0 %471
    %475 = vrot.lane.b32.xlu0 %v439, 8
    %v476 = vpop.permute.xlu0 %475
    %477 = vrot.lane.b32.xlu0 %v459, 8
    %v478 = vpop.permute.xlu0 %477
    %v479 = vsel %vm362, %v476, %v478
    %481 = vrot.lane.b32.xlu0 %v459, 112
    %v482 = vpop.permute.xlu0 %481
    %484 = vrot.lane.b32.xlu0 %v459, 88
    %v485 = vpop.permute.xlu0 %484
    %v487 = vrot.slane %v466, 4
    %v488 = vsel %vm170, %v487, %v439
    %v490 = vunpack.c.l.s4 1983009808
    %v491 = vunpack.c.0.s8 %v490
    %v492 = vperm.slane %v488, %v491
    %v493 = vrot.slane %v469, 4
    %v494 = vsel %vm170, %v493, %v463
    %v496 = vunpack.c.l.s4 1983009808
    %v497 = vunpack.c.0.s8 %v496
    %v498 = vperm.slane %v494, %v497
    %v499 = vrot.slane %v482, 4
    %v500 = vsel %vm170, %v499, %v472
    %v502 = vunpack.c.l.s4 1983009808
    %v503 = vunpack.c.0.s8 %v502
    %v504 = vperm.slane %v500, %v503
    %v505 = vrot.slane %v485, 4
    %v506 = vsel %vm170, %v505, %v479
    %v508 = vunpack.c.l.s4 1983009808
    %v509 = vunpack.c.0.s8 %v508
    %v510 = vperm.slane %v506, %v509
    %v511 = vrot.slane %v498, 4
    %v512 = vsel %vm170, %v511, %v492
    %v514 = vunpack.c.l.s4 1934713408
    %v515 = vunpack.c.0.s8 %v514
    %v516 = vperm.slane %v512, %v515
    %v517 = vrot.slane %v510, 4
    %v518 = vsel %vm170, %v517, %v504
    %v520 = vunpack.c.l.s4 1934713408
    %v521 = vunpack.c.0.s8 %v520
    %v522 = vperm.slane %v518, %v521
    %v523 = vrot.slane %v522, 4
    %v524 = vsel %vm170, %v523, %v516
    %v525 = vrot.slane %v516, 4
    %v526 = vsel %vm170, %v522, %v525
    %527 = vrot.lane.b32.xlu0 %v342, 16
    %v528 = vpop.permute.xlu0 %527
    %v529 = vsel %vm210, %v528, %v342
    %530 = vrot.lane.b32.xlu0 %v343, 16
    %v531 = vpop.permute.xlu0 %530
    %v532 = vsel %vm210, %v531, %v343
    %533 = vrot.lane.b32.xlu0 %v529, 16
    %v534 = vpop.permute.xlu0 %533
    %535 = vrot.lane.b32.xlu0 %v532, 16
    %v536 = vpop.permute.xlu0 %535
    %v537 = vsel %vm210, %v534, %v342
    %v538 = vsel %vm210, %v536, %v343
    %541 = vrot.lane.b32.xlu0 %v537, 113
    %v542 = vpop.permute.xlu0 %541
    %543 = vrot.lane.b32.xlu0 %v538, 113
    %v544 = vpop.permute.xlu0 %543
    %v547 = vsel %vm225, %v542, 0.0
    %v548 = vsel %vm225, %v544, 0.0
    %549 = vrot.lane.b32.xlu0 %v537, 127
    %v550 = vpop.permute.xlu0 %549
    %551 = vrot.lane.b32.xlu0 %v538, 127
    %v552 = vpop.permute.xlu0 %551
    %v555 = vsel %vm238, %v550, 0.0
    %v556 = vsel %vm238, %v552, 0.0
    %v557 = vpack.c.bf16 %v524, %v524
    %v558 = vpack.c.bf16 %v526, %v526
    %v559 = vpack.c.bf16 %v547, %v547
    %v560 = vpack.c.bf16 %v342, %v342
    %v561 = vpack.c.bf16 %v555, %v555
    %v562 = vpack.c.bf16 %v548, %v548
    %v563 = vpack.c.bf16 %v343, %v343
    %v564 = vpack.c.bf16 %v556, %v556
    %v565 = vperm.slane %v459, 0
    %v566 = vlaneseq
    %v567 = vshrl.u32 %v566, 7
    %v568 = vadd.s32 %v567, 64
    %569 = vset.pattern.permute.xlu0 %v568
    %570 = vperm.xlu0 %569, %v565
    %v571 = vpop.permute.xlu0 %570
    %v572 = vperm.slane %v459, 1
    %v573 = vlaneseq
    %v574 = vshrl.u32 %v573, 7
    %v575 = vadd.s32 %v574, 64
    %576 = vset.pattern.permute.xlu0 %v575
    %577 = vperm.xlu0 %576, %v572
    %v578 = vpop.permute.xlu0 %577
    %v582 = vunpack.c.l.b16 %v559
    %v583 = vunpack.c.l.b16 %v560
    %v584 = vunpack.c.l.b16 %v561
    %v585 = vpack.c.b16 %v583, %v582
    %v586 = vpack.c.b16 %v584, %v584
    %vm588 = vcmask 195584
    %v590 = vsel %vm588, %v557, 0
    %v593 = vsel %vm71, %v586, 0
    %595 = vmatpush.bf16.msra.mxu0 0
    %596 = vmatpush.bf16.msra.mxu0 0
    %597 = vmatpush.bf16.msra.mxu0 0
    %598 = vmatpush.bf16.msra.mxu0 0
    %599 = vmatpush.bf16.msra.mxu0 0
    %600 = vmatpush.bf16.msra.mxu0 0
    %601 = vmatpush.bf16.msra.mxu0 %v593
    %602 = vmatpush.bf16.msra.mxu0 %v585
    %603 = vmatmul.bf16.gmra.mxu0 %v590
    %v604 = vpop.f32.mrf.mxu0
    %v605 = vadd.f32 %v571, %v604
    %v606 = vpop.f32.mrf.mxu0
    %607 = vdwg.mxu0
    %v611 = vunpack.c.l.b16 %v562
    %v612 = vunpack.c.l.b16 %v563
    %v613 = vunpack.c.l.b16 %v564
    %v614 = vpack.c.b16 %v612, %v611
    %v615 = vpack.c.b16 %v613, %v613
    %v618 = vsel %vm588, %v558, 0
    %v621 = vsel %vm71, %v615, 0
    %623 = vmatpush.bf16.msra.mxu0 0
    %624 = vmatpush.bf16.msra.mxu0 0
    %625 = vmatpush.bf16.msra.mxu0 0
    %626 = vmatpush.bf16.msra.mxu0 0
    %627 = vmatpush.bf16.msra.mxu0 0
    %628 = vmatpush.bf16.msra.mxu0 0
    %629 = vmatpush.bf16.msra.mxu0 %v621
    %630 = vmatpush.bf16.msra.mxu0 %v614
    %631 = vmatmul.bf16.gmra.mxu0 %v618
    %v632 = vpop.f32.mrf.mxu0
    %v633 = vadd.f32 %v578, %v632
    %v634 = vpop.f32.mrf.mxu0
    %635 = vdwg.mxu0
    %v636 = vld [vmem:[%s9] sm:$0xff]
    %638 = vset.pattern.permute.xlu0 0
    %639 = vperm.xlu0 %638, %v636
    %v640 = vpop.permute.xlu0 %639
    %v642 = vadd.f32 %v605, %v640
    %v643 = vadd.f32 %v633, %v640
    %v644 = vadd.f32 %v642, %v342
    %v645 = vadd.f32 %v643, %v343
    %vm646 = vcmp.gt.f32.partialorder %v644, 0.0
    %vm647 = vcmp.gt.f32.partialorder %v645, 0.0
    %v648 = vmul.f32 %v644, 0.01
    %v649 = vmul.f32 %v645, 0.01
    %v650 = vsel %vm646, %v644, %v648
    %v651 = vsel %vm647, %v645, %v649
    %652 = vst.msk [vmem:[#allocation2] sm:$0xff] %vm291, %v650
    %653 = vst.msk [vmem:[#allocation2 + $0x8] sm:$0xff] %vm291, %v651
    // Predicated region
    $region42: #{tpu_custom_call.1} parent=1 // pred_check
      _
    $region43: #{tpu_custom_call.1} parent=1 // pred_check_branch
      %655 = sbr.rel (0) target = $region45
    $region44: #{tpu_custom_call.1} parent=1 // pred_region
      %657 = vsyncadd [#allocation3], 0
      %s658 = sshll.u32 [#allocation2], 4
      %s659 = int_to_ptr.vmem [resolvable:$true] %s658
      %s660 = sshll.u32 %s10, 4
      %s661 = int_to_ptr.hbm [resolvable:$true] %s660
      %666 = dma.vmem_to_hbm [thread:$0]  %s659, 256, %s661, [#allocation3], 128, 128, 8
    $region45: #{tpu_custom_call.1} parent=1 // pred_fallthru
      _
    // Predicated region
    $region46: #{tpu_custom_call.1} parent=1 // pred_check
      _
    $region47: #{tpu_custom_call.1} parent=1 // pred_check_branch
      %668 = sbr.rel (0) target = $region49
    $region48: #{tpu_custom_call.1} parent=1 // pred_region
      %670 = dma.done [#allocation3], 256
    $region49: #{tpu_custom_call.1} parent=1 // pred_fallthru
      _
    %671 = vsyncpa [#allocation3], 1

</llo_original>
